<compile_context>
chip_gen: v5e
topology: v5e:2x2
jax: 0.10.0
libtpu: 0.0.40
codegen_flags: <defaults>
</compile_context>

<pallas_src>
import math

import jax
import jax.numpy as jnp
from jax.experimental import pallas as pl
from jax.experimental.pallas import tpu as pltpu

LANES = 128
SUBLANES = 8


def build_freqs(dims, sizes, theta=10000.0):
    """Replicates RotaryEmbeddingND.__init__ buffer construction (flatten=True)."""
    all_freqs = []
    n = len(dims)
    for i, (dim, seq_len) in enumerate(zip(dims, sizes)):
        inv = 1.0 / (theta ** (jnp.arange(0, dim, 2)[: dim // 2].astype(jnp.float32) / dim))
        pos = jnp.arange(seq_len, dtype=jnp.float32)
        f = pos[:, None] * inv[None, :]                 # (seq_len, dim//2)
        f = jnp.repeat(f, 2, axis=-1)                   # (seq_len, dim): f0,f0,f1,f1,...
        shape = [1] * n + [dim]
        shape[i] = seq_len
        f = jnp.broadcast_to(f.reshape(shape), tuple(sizes) + (dim,))
        all_freqs.append(f)
    freqs = jnp.concatenate(all_freqs, axis=-1)         # (*sizes, sum(dims))
    return freqs.reshape(-1, freqs.shape[-1])           # (prod(sizes), D)


def _rope_kernel(x_ref, tab_ref, o_ref):
    """x_ref/o_ref: (tile_rows, 128) in x's dtype; tab_ref: (3, tile_rows, 128)."""
    x = x_ref[...]                                      # native dtype (swap is exact)
    # Adjacent-pair access via lane rotations (XLU slot, not VALU). The sign and
    # lane parity are folded into the tables (sin_even is zero on odd lanes and
    # vice versa), so no iota/compare/select is needed and the wrap-around lanes
    # (0 and 127) are multiplied by exactly zero.
    left = pltpu.roll(x, LANES - 1, 1)                  # left[j]  = x[j + 1]
    right = pltpu.roll(x, 1, 1)                         # right[j] = x[j - 1]
    cos = tab_ref[0]                                    # (tile_rows, 128)
    sin_even = tab_ref[1]                               # -sin on even lanes, 0 on odd
    sin_odd = tab_ref[2]                                # +sin on odd lanes, 0 on even
    acc = x.astype(jnp.float32) * cos
    acc = acc + left.astype(jnp.float32) * sin_even
    acc = acc + right.astype(jnp.float32) * sin_odd
    o_ref[...] = acc.astype(o_ref.dtype)


def _vmem_budget_and_limit():
    """Generation-aware per-step VMEM budget and scoped-VMEM limit."""
    try:
        kind = jax.devices()[0].device_kind.lower()
    except Exception:
        kind = ""
    small = any(tag in kind for tag in ("v2", "v3", "v5 lite", "v5e", "v5lite"))
    if small:
        return 10 << 20, None            # stay inside the 16 MiB scoped default
    return 28 << 20, 48 << 20            # v4/v5p/v6e/v7x: bigger blocks, raise scoped VMEM


class RotaryEmbeddingND:
    """Axial RoPE (flatten=True semantics) with a Pallas TPU forward kernel."""

    def __init__(self, dims, sizes, theta=10000.0):
        self.dims = tuple(int(d) for d in dims)
        self.sizes = tuple(int(s) for s in sizes)
        self.theta = float(theta)
        self.D = sum(self.dims)
        assert self.D % 2 == 0, "RoPE feature dimension must be even"
        self.N_full = math.prod(self.sizes)
        self.freqs = build_freqs(self.dims, self.sizes, self.theta)   # (N_full, D) f32
        self._base_cache = {}    # N -> (3, rows, 128) f32 packed table
        self._tab_cache = {}     # (N, k, dtype_name) -> (3, k*rows, 128)

    # ----- layout ---------------------------------------------------------
    def _layout(self, N):
        L = N * self.D
        rows0 = pl.cdiv(L, LANES)
        fast = (L % LANES == 0) and (rows0 % SUBLANES == 0)
        rows = rows0 if fast else pl.cdiv(rows0, SUBLANES) * SUBLANES
        return L, rows, fast

    # ----- tables (built once, cached like the PyTorch buffer) -------------
    def _base_table(self, N):
        tab = self._base_cache.get(N)
        if tab is None:
            L, rows, _ = self._layout(N)
            f = self.freqs[:N]                           # (N, D) f32
            c = jnp.cos(f)
            s = jnp.sin(f)
            even = (jnp.arange(self.D) % 2) == 0
            s_even = jnp.where(even, -s, 0.0)            # pair (x0,x1): even gets -x1*sin
            s_odd = jnp.where(even, 0.0, s)              # odd gets +x0*sin
            tab = jnp.stack([c, s_even, s_odd], 0).reshape(3, L)
            if rows * LANES != L:                        # ragged fallback only
                tab = jnp.pad(tab, ((0, 0), (0, rows * LANES - L)))
            tab = tab.reshape(3, rows, LANES)
            self._base_cache[N] = tab
        return tab

    def _table(self, N, k, dtype):
        key = (N, k, jnp.dtype(dtype).name)
        tab = self._tab_cache.get(key)
        if tab is None:
            tab = self._base_table(N)
            if jnp.dtype(dtype) != tab.dtype:
                tab = tab.astype(dtype)
            if k > 1:
                tab = jnp.tile(tab, (1, k, 1))           # one-time, cached
            self._tab_cache[key] = tab
        return tab

    # ----- forward ----------------------------------------------------------
    def __call__(self, x, *, max_block_rows=None, vmem_budget_bytes=None):
        orig_shape = x.shape
        N, D = x.shape[-2], x.shape[-1]
        assert D == self.D, f"feature dim {D} != sum(dims) {self.D}"
        assert N <= self.N_full, "sequence longer than the precomputed freqs buffer"
        B = math.prod(x.shape[:-2]) if x.ndim > 2 else 1
        B = max(int(B), 1)

        L, rows, fast = self._layout(N)
        Lp = rows * LANES

        x_item = jnp.dtype(x.dtype).itemsize
        # Halve table stream width for low-precision activations; keep f32 tables
        # for f32 activations (exact vs. reference).
        tab_dtype = jnp.float32 if x.dtype == jnp.float32 else jnp.bfloat16
        tab_item = jnp.dtype(tab_dtype).itemsize

        budget, vmem_limit = _vmem_budget_and_limit()
        if vmem_budget_bytes is not None:
            budget = int(vmem_budget_bytes)
        # Real per-step footprint per 128-lane row: double-buffered x in + out,
        # double-buffered packed (3,·,128) table block, ~4 full f32 temporaries.
        per_row = LANES * (4 * x_item + 6 * tab_item + 16)
        cap_rows = max(SUBLANES, (budget // per_row) // SUBLANES * SUBLANES)
        if max_block_rows is not None:
            cap_rows = max(SUBLANES, min(cap_rows, (int(max_block_rows) // SUBLANES) * SUBLANES))

        xf = x.reshape(B, L)
        if not fast:
            # Ragged fallback (N*D not a multiple of 1024): one extra pad pass.
            xf = jnp.pad(xf, ((0, 0), (0, Lp - L)))

        if rows <= cap_rows:
            # ---- Case B: whole images are small -> fold k of them per block. ----
            k = max(1, min(cap_rows // rows, B))
            if B >= 2:                                   # keep >=2 grid steps (megacore)
                k = min(k, (B + 1) // 2)
            tile_rows = k * rows
            tab = self._table(N, k, tab_dtype)           # (3, k*rows, 128), resident block
            x2 = xf.reshape(B * rows, LANES)
            out = pl.pallas_call(
                _rope_kernel,
                out_shape=jax.ShapeDtypeStruct((B * rows, LANES), x.dtype),
                grid=(pl.cdiv(B, k),),
                in_specs=[
                    pl.BlockSpec((tile_rows, LANES), lambda i: (i, 0)),
                    pl.BlockSpec((3, tile_rows, LANES), lambda i: (0, 0, 0)),
                ],
                out_specs=pl.BlockSpec((tile_rows, LANES), lambda i: (i, 0)),
                compiler_params=pltpu.CompilerParams(
                    dimension_semantics=("parallel",),
                    vmem_limit_bytes=vmem_limit),
            )(x2, tab)
        else:
            # ---- Case A: row-tile one image; batch is the innermost grid axis ----
            # so the table block (indexed by the row tile only) is reused across B.
            tile_rows = cap_rows
            tab = self._table(N, 1, tab_dtype)           # (3, rows, 128)
            x3 = xf.reshape(B, rows, LANES)
            out = pl.pallas_call(
                _rope_kernel,
                out_shape=jax.ShapeDtypeStruct((B, rows, LANES), x.dtype),
                grid=(pl.cdiv(rows, tile_rows), B),
                in_specs=[
                    pl.BlockSpec((None, tile_rows, LANES), lambda r, b: (b, r, 0)),
                    pl.BlockSpec((3, tile_rows, LANES), lambda r, b: (0, r, 0)),
                ],
                out_specs=pl.BlockSpec((None, tile_rows, LANES), lambda r, b: (b, r, 0)),
                compiler_params=pltpu.CompilerParams(
                    dimension_semantics=("parallel", "parallel"),
                    vmem_limit_bytes=vmem_limit),
            )(x3, tab)

        outf = out.reshape(B, Lp)
        if not fast:
            outf = outf[:, :L]                           # fallback-only slice
        return outf.reshape(orig_shape)


def _reference(x, freqs_N):
    """Pure-JAX reference: x*cos(f) + rotate_half(x)*sin(f)."""
    D = x.shape[-1]
    xr = x.reshape(*x.shape[:-1], D // 2, 2)
    rot = jnp.stack([-xr[..., 1], xr[..., 0]], axis=-1).reshape(x.shape)
    return x * jnp.cos(freqs_N) + rot * jnp.sin(freqs_N)


if __name__ == "__main__":
    # RotaryEmbeddingND(dims=(16, 8, 8), sizes=(4, 4, 4), flatten=True)
    dims, sizes, theta = (16, 8, 8), (4, 4, 4), 10000.0
    rope = RotaryEmbeddingND(dims, sizes, theta)
    N, D = math.prod(sizes), sum(dims)                   # 64 positions, 32 features

    key = jax.random.PRNGKey(0)
    x = jax.random.normal(key, (2, 2, N, D), dtype=jnp.float32)   # (batch, heads, N, D)

    out = jax.block_until_ready(rope(x))                           # Case B (batch fold)
    out_tiled = jax.block_until_ready(rope(x, max_block_rows=8))   # Case A (row tiling)

    ref = _reference(x, rope.freqs[:N])
    assert out.shape == x.shape and out.dtype == x.dtype
    assert jnp.allclose(out, ref, atol=1e-5, rtol=1e-5), "mismatch vs reference"
    assert jnp.allclose(out_tiled, ref, atol=1e-5, rtol=1e-5), "mismatch vs reference (tiled)"

    # Ragged fallback path: N*D = 240 is not a multiple of 128 -> padded layout.
    rope2 = RotaryEmbeddingND((6, 10), (3, 5), theta)
    N2, D2 = 15, 16
    x2 = jax.random.normal(jax.random.PRNGKey(1), (3, N2, D2), dtype=jnp.float32)
    out2 = jax.block_until_ready(rope2(x2))
    ref2 = _reference(x2, rope2.freqs[:N2])
    assert jnp.allclose(out2, ref2, atol=1e-5, rtol=1e-5), "mismatch vs reference (ragged)"

    print("KERNEL_OK")
</pallas_src>

<mosaic_0001>
module attributes {stable_mosaic.version = 11 : i64} {
  func.func @_rope_kernel(%arg0: i32, %arg1: memref<32x128xf32, #tpu.memory_space<vmem>>, %arg2: memref<3x32x128xf32, #tpu.memory_space<vmem>>, %arg3: memref<32x128xf32, #tpu.memory_space<vmem>>) attributes {dimension_semantics = [#tpu.dimension_semantics<parallel>], iteration_bounds = array<i64: 2>, scalar_prefetch = 0 : i64, scratch_operands = 0 : i64, tpu.core_type = #tpu.core_type<tc>, window_params = [{transform_indices = @transform_0, window_bounds = array<i64: 32, 128>}, {pipeline_mode = #tpu.pipeline_mode<synchronous>, transform_indices = @transform_1, window_bounds = array<i64: 3, 32, 128>}, {transform_indices = @transform_2, window_bounds = array<i64: 32, 128>}]} {
    %c0 = arith.constant 0 : index
    %c0_0 = arith.constant 0 : index
    %0 = vector.load %arg1[%c0, %c0_0] : memref<32x128xf32, #tpu.memory_space<vmem>>, vector<32x128xf32>
    %c127_i32 = arith.constant 127 : i32
    %1 = tpu.dynamic_rotate %0 by %c127_i32 dim 1 : vector<32x128xf32>, i32 -> vector<32x128xf32>
    %c1_i32 = arith.constant 1 : i32
    %2 = tpu.dynamic_rotate %0 by %c1_i32 dim 1 : vector<32x128xf32>, i32 -> vector<32x128xf32>
    %c0_1 = arith.constant 0 : index
    %c0_2 = arith.constant 0 : index
    %c0_3 = arith.constant 0 : index
    %3 = vector.load %arg2[%c0_1, %c0_2, %c0_3] : memref<3x32x128xf32, #tpu.memory_space<vmem>>, vector<1x32x128xf32>
    %4 = vector.shape_cast %3 : vector<1x32x128xf32> to vector<32x128xf32>
    %c1 = arith.constant 1 : index
    %c0_4 = arith.constant 0 : index
    %c0_5 = arith.constant 0 : index
    %5 = vector.load %arg2[%c1, %c0_4, %c0_5] : memref<3x32x128xf32, #tpu.memory_space<vmem>>, vector<1x32x128xf32>
    %6 = vector.shape_cast %5 : vector<1x32x128xf32> to vector<32x128xf32>
    %c2 = arith.constant 2 : index
    %c0_6 = arith.constant 0 : index
    %c0_7 = arith.constant 0 : index
    %7 = vector.load %arg2[%c2, %c0_6, %c0_7] : memref<3x32x128xf32, #tpu.memory_space<vmem>>, vector<1x32x128xf32>
    %8 = vector.shape_cast %7 : vector<1x32x128xf32> to vector<32x128xf32>
    %9 = arith.mulf %0, %4 : vector<32x128xf32>
    %10 = arith.mulf %1, %6 : vector<32x128xf32>
    %11 = arith.addf %9, %10 : vector<32x128xf32>
    %12 = arith.mulf %2, %8 : vector<32x128xf32>
    %13 = arith.addf %11, %12 : vector<32x128xf32>
    %c0_8 = arith.constant 0 : index
    %c0_9 = arith.constant 0 : index
    %14 = vector.load %arg3[%c0_8, %c0_9] : memref<32x128xf32, #tpu.memory_space<vmem>>, vector<32x128xf32>
    tpu.vector_store %arg3[%c0_8, %c0_9], %13 {strides = array<i32>} : memref<32x128xf32, #tpu.memory_space<vmem>>, vector<32x128xf32>,
    return
  }
  func.func @transform_0(%arg0: i32) -> (i32, i32) {
    %c0_i32 = arith.constant 0 : i32
    %c0_i32_0 = arith.constant 0 : i32
    return %arg0, %c0_i32 : i32, i32
  }
  func.func @transform_1(%arg0: i32) -> (i32, i32, i32) {
    %c0_i32 = arith.constant 0 : i32
    %c0_i32_0 = arith.constant 0 : i32
    %c0_i32_1 = arith.constant 0 : i32
    %c0_i32_2 = arith.constant 0 : i32
    return %c0_i32, %c0_i32_0, %c0_i32_1 : i32, i32, i32
  }
  func.func @transform_2(%arg0: i32) -> (i32, i32) {
    %c0_i32 = arith.constant 0 : i32
    %c0_i32_0 = arith.constant 0 : i32
    return %arg0, %c0_i32 : i32, i32
  }
}

</mosaic_0001>

<llo_original>
// kernel: tpu_custom_call.1
$region0: #{tpu_custom_call.1}
  #allocation0 [shape = 'u32[]', space=smem, size = 0x4, offset = 0x4, fixed_abs, tag = 'smem constant byte address 0x4 - core index']
  #allocation1 [shape = 'u32[72,128]{1,0:T(1,128)}', space=vmem, size = 0x9000, scoped, tag = 'internal scratch']
  %s0 = inlined_call_operand.hbm [shape: f32[64,128], index: 0, kind: input, shape index: {}]
  %s1 = inlined_call_operand.hbm [shape: f32[3,32,128], index: 1, kind: input, shape index: {}]
  %s2 = inlined_call_operand.hbm [shape: f32[64,128], index: 2, kind: output, shape index: {}]
  %s3 = sld [smem:[#allocation0]]
  $region49: #{tpu_custom_call.1} parent=0
    _
  %s5 = ssub.s32 1, %s3
  %s6 = scalar_select 0, %s5, %s3
  $region1: #{tpu_custom_call.1} parent=0
    #allocation2 [shape = 'u8[32768]{0}', space=vmem, size = 0x8000, scoped, tag = 'input window, operand 0']
    #allocation3 [shape = 's32[2]{0}', space=sflag, size = 0x8, scoped, tag = 'scoped memory for tpu_custom_call.1']
    #allocation4 [shape = 's32[2]{0}', space=sflag, size = 0x8, scoped, tag = 'scoped memory for tpu_custom_call.1']
    #allocation5 [shape = 'u8[49152]{0}', space=vmem, size = 0xc000, scoped, tag = 'input window, operand 1, single buffered']
    #allocation6 [shape = 's32[1]{0}', space=sflag, size = 0x4, scoped, tag = 'scoped memory for tpu_custom_call.1']
    #allocation7 [shape = 'u8[32768]{0}', space=vmem, size = 0x8000, scoped, tag = 'output window, operand 0']
    %7 = vsyncpa [#allocation3], 0
    %s8 = scalar_lea.sflag [#allocation3], 1
    %9 = vsyncpa %s8, 0
    %10 = vsyncpa [#allocation6], 0
    %11 = vsyncpa [#allocation4], 0
    %s12 = scalar_lea.sflag [#allocation4], 1
    %13 = vsyncpa %s12, 0
    loop: start=0, step=1, limit=4
    $region2: #{tpu_custom_call.1} parent=1 // loop_pre_header
      _
    $region3: #{tpu_custom_call.1} parent=1 // loop_header
      %s15 = sphi 0, %s19
      %p16 = scmp.ge.s32.totalorder %s15, 4
      %s25 = sphi 0, %s27
      %s28 = sphi 0, %s25
      %s29 = sphi 0, %s28
      %s45 = sphi 0, %s29
      %s49 = sphi 0, %s49
      %s51 = sphi 0, %s49
      %s52 = sphi 0, %s51
      %s66 = sphi 0, %s52
      %s72 = sphi 0, %s74
      %s75 = sphi 0, %s72
      %s76 = sphi 0, %s75
      %s92 = sphi 0, %s76
    $region4: #{tpu_custom_call.1} parent=1 // loop_header_branch
      %18 = sbr.rel (%p16) target = $region8
    $region5: #{tpu_custom_call.1} parent=1 // loop_body
      %s20 = ssub.s32 %s15, 1
      %s21 = ssub.s32 %s15, 2
      %s22 = sadd.s32 %s15, 1
      %s23 = ssub.s32 %s15, %s22
      %p24 = scmp.eq.s32.totalorder %s23, 0
      %s26 = sadd.s32 %s25, 1
      %s27 = scalar_select %p24, %s25, %s26
      %p30 = pneg %p24
      %p31 = scmp.eq.s32.totalorder %s15, 1
      %p32 = por %p30, %p31
      %p33 = scmp.ne.s32.totalorder %s25, %s28
      %p34 = scmp.eq.s32.totalorder %s15, 0
      %p35 = por %p33, %p34
      %p36 = scmp.ne.s32.totalorder %s25, %s28
      %p37 = scmp.eq.s32.totalorder %s20, 1
      %p38 = por %p36, %p37
      %p39 = scmp.ne.s32.totalorder %s28, %s29
      %p40 = scmp.eq.s32.totalorder %s20, 0
      %p41 = por %p39, %p40
      %p42 = scmp.ne.s32.totalorder %s28, %s29
      %p43 = scmp.eq.s32.totalorder %s21, 1
      %p44 = por %p42, %p43
      %p46 = scmp.ne.s32.totalorder %s29, %s45
      %p47 = scmp.eq.s32.totalorder %s21, 0
      %p48 = por %p46, %p47
      %s50 = sadd.s32 %s49, 1
      %p53 = scmp.eq.s32.totalorder %s15, 1
      %p54 = scmp.ne.s32.totalorder %s49, %s51
      %p55 = scmp.eq.s32.totalorder %s15, 0
      %p56 = por %p54, %p55
      %p57 = scmp.ne.s32.totalorder %s49, %s51
      %p58 = scmp.eq.s32.totalorder %s20, 1
      %p59 = por %p57, %p58
      %p60 = scmp.ne.s32.totalorder %s51, %s52
      %p61 = scmp.eq.s32.totalorder %s20, 0
      %p62 = por %p60, %p61
      %p63 = scmp.ne.s32.totalorder %s51, %s52
      %p64 = scmp.eq.s32.totalorder %s21, 1
      %p65 = por %p63, %p64
      %p67 = scmp.ne.s32.totalorder %s52, %s66
      %p68 = scmp.eq.s32.totalorder %s21, 0
      %p69 = por %p67, %p68
      %s70 = ssub.s32 %s15, %s22
      %p71 = scmp.eq.s32.totalorder %s70, 0
      %s73 = sadd.s32 %s72, 1
      %s74 = scalar_select %p71, %s72, %s73
      %p77 = pneg %p71
      %p78 = scmp.eq.s32.totalorder %s15, 1
      %p79 = por %p77, %p78
      %p80 = scmp.ne.s32.totalorder %s72, %s75
      %p81 = scmp.eq.s32.totalorder %s15, 0
      %p82 = por %p80, %p81
      %p83 = scmp.ne.s32.totalorder %s72, %s75
      %p84 = scmp.eq.s32.totalorder %s20, 1
      %p85 = por %p83, %p84
      %p86 = scmp.ne.s32.totalorder %s75, %s76
      %p87 = scmp.eq.s32.totalorder %s20, 0
      %p88 = por %p86, %p87
      %p89 = scmp.ne.s32.totalorder %s75, %s76
      %p90 = scmp.eq.s32.totalorder %s21, 1
      %p91 = por %p89, %p90
      %p93 = scmp.ne.s32.totalorder %s76, %s92
      %p94 = scmp.eq.s32.totalorder %s21, 0
      %p95 = por %p93, %p94
      %p96 = scmp.le.s32.totalorder 1, %s15
      %p97 = scmp.lt.s32.totalorder %s15, 3
      %p98 = pnand %p96, %p97
      %p99 = pneg %p98
      // Predicated region
      $region9: #{tpu_custom_call.1} parent=5 // pred_check
        _
      $region10: #{tpu_custom_call.1} parent=5 // pred_check_branch
        %101 = sbr.rel (%p98) target = $region12
      $region11: #{tpu_custom_call.1} parent=5 // pred_region
        %s102 = ssub.s32 %s15, 1
        // Predicated region
        $region13: #{tpu_custom_call.1} parent=11 // pred_check
          %p103 = pneg %p62
        $region14: #{tpu_custom_call.1} parent=11 // pred_check_branch
          %105 = sbr.rel (%p103) target = $region16
        $region15: #{tpu_custom_call.1} parent=11 // pred_region
          %107 = vsyncadd [#allocation6], 0
          %s108 = sshll.u32 %s1, 4
          %s109 = int_to_ptr.hbm [resolvable:$true] %s108
          %s110 = sshll.u32 [#allocation5], 4
          %s111 = int_to_ptr.vmem [resolvable:$true] %s110
          %116 = dma.hbm_to_vmem [thread:$0]  %s109, 1536, %s111, [#allocation6], 128, 128, 8
        $region16: #{tpu_custom_call.1} parent=11 // pred_fallthru
          _
      $region12: #{tpu_custom_call.1} parent=5 // pred_fallthru
        _
      %p117 = scmp.lt.s32.totalorder %s15, 2
      // Predicated region
      $region17: #{tpu_custom_call.1} parent=5 // pred_check
        %p118 = pneg %p117
      $region18: #{tpu_custom_call.1} parent=5 // pred_check_branch
        %120 = sbr.rel (%p118) target = $region20
      $region19: #{tpu_custom_call.1} parent=5 // pred_region
        // Predicated region
        $region21: #{tpu_custom_call.1} parent=19 // pred_check
          %p121 = pneg %p35
        $region22: #{tpu_custom_call.1} parent=19 // pred_check_branch
          %123 = sbr.rel (%p121) target = $region24
        $region23: #{tpu_custom_call.1} parent=19 // pred_region
          %s124 = sand.u32 %s25, 1
          %s125 = scalar_lea.sflag [#allocation3], %s124
          %s126 = sand.u32 %s25, 1
          %s127 = smul.addr %s126, 32
          %s128 = scalar_lea.vmem [#allocation2], %s127
          %s129 = smul.u32 4, %s15
          %131 = vsyncadd %s125, 0
          %s132 = smul.addr %s129, 8
          %s133 = scalar_lea.hbm %s0, %s132
          %s134 = sshll.u32 %s133, 4
          %s135 = int_to_ptr.hbm [resolvable:$true] %s134
          %s136 = sshll.u32 %s128, 4
          %s137 = int_to_ptr.vmem [resolvable:$true] %s136
          %142 = dma.hbm_to_vmem [thread:$0]  %s135, 512, %s137, %s125, 128, 128, 8
        $region24: #{tpu_custom_call.1} parent=19 // pred_fallthru
          _
      $region20: #{tpu_custom_call.1} parent=5 // pred_fallthru
        _
      %p143 = scmp.le.s32.totalorder 1, %s15
      %p144 = scmp.lt.s32.totalorder %s15, 3
      %p145 = pnand %p143, %p144
      %p146 = pneg %p145
      // Predicated region
      $region25: #{tpu_custom_call.1} parent=5 // pred_check
        _
      $region26: #{tpu_custom_call.1} parent=5 // pred_check_branch
        %148 = sbr.rel (%p145) target = $region28
      $region27: #{tpu_custom_call.1} parent=5 // pred_region
        %s149 = ssub.s32 %s15, 1
        %s150 = sand.u32 %s28, 1
        %s151 = scalar_lea.sflag [#allocation3], %s150
        %s152 = sand.u32 %s28, 1
        %s153 = smul.addr %s152, 32
        %s154 = scalar_lea.vmem [#allocation2], %s153
        // Predicated region
        $region29: #{tpu_custom_call.1} parent=27 // pred_check
          %p155 = pneg %p41
        $region30: #{tpu_custom_call.1} parent=27 // pred_check_branch
          %157 = sbr.rel (%p155) target = $region32
        $region31: #{tpu_custom_call.1} parent=27 // pred_region
          %159 = dma.done %s151, 512
        $region32: #{tpu_custom_call.1} parent=27 // pred_fallthru
          _
        // Predicated region
        $region33: #{tpu_custom_call.1} parent=27 // pred_check
          %p160 = pneg %p62
        $region34: #{tpu_custom_call.1} parent=27 // pred_check_branch
          %162 = sbr.rel (%p160) target = $region36
        $region35: #{tpu_custom_call.1} parent=27 // pred_region
          %164 = dma.done [#allocation6], 1536
        $region36: #{tpu_custom_call.1} parent=27 // pred_fallthru
          _
        %s165 = sand.u32 %s28, 1
        %s166 = scalar_lea.sflag [#allocation3], %s165
        %s167 = sand.u32 %s28, 1
        %s168 = smul.addr %s167, 32
        %s169 = scalar_lea.vmem [#allocation2], %s168
        %p170 = pneg %p41
        %p171 = pneg %p38
        %p172 = pneg %p62
        %p173 = pneg %p59
        %p174 = pneg %p88
        %p175 = pneg %p85
        %s176 = sand.u32 %s75, 1
        %s177 = scalar_lea.sflag [#allocation4], %s176
        %s178 = sand.u32 %s75, 1
        %s179 = smul.addr %s178, 32
        %s180 = scalar_lea.vmem [#allocation7], %s179
        %s181 = smul.u32 4, %s20
        %s182 = smul.u32 4, %s20
        %v183 = vld [vmem:[%s154] sm:$0xff]
        %v184 = vld [vmem:[%s154 + $0x8] sm:$0xff]
        %v185 = vld [vmem:[%s154 + $0x10] sm:$0xff]
        %v186 = vld [vmem:[%s154 + $0x18] sm:$0xff]
        %187 = vrot.lane.b32.xlu0 %v183, 127
        %v188 = vpop.permute.xlu0 %187
        %189 = vrot.lane.b32.xlu0 %v184, 127
        %v190 = vpop.permute.xlu0 %189
        %191 = vrot.lane.b32.xlu0 %v185, 127
        %v192 = vpop.permute.xlu0 %191
        %193 = vrot.lane.b32.xlu0 %v186, 127
        %v194 = vpop.permute.xlu0 %193
        %195 = vrot.lane.b32.xlu0 %v183, 1
        %v196 = vpop.permute.xlu0 %195
        %197 = vrot.lane.b32.xlu0 %v184, 1
        %v198 = vpop.permute.xlu0 %197
        %199 = vrot.lane.b32.xlu0 %v185, 1
        %v200 = vpop.permute.xlu0 %199
        %201 = vrot.lane.b32.xlu0 %v186, 1
        %v202 = vpop.permute.xlu0 %201
        %v203 = vld [vmem:[#allocation5] sm:$0xff]
        %v204 = vld [vmem:[#allocation5 + $0x8] sm:$0xff]
        %v205 = vld [vmem:[#allocation5 + $0x10] sm:$0xff]
        %v206 = vld [vmem:[#allocation5 + $0x18] sm:$0xff]
        %s207 = scalar_lea.vmem [#allocation5], 32
        %v208 = vld [vmem:[%s207] sm:$0xff]
        %v209 = vld [vmem:[%s207 + $0x8] sm:$0xff]
        %v210 = vld [vmem:[%s207 + $0x10] sm:$0xff]
        %v211 = vld [vmem:[%s207 + $0x18] sm:$0xff]
        %s212 = scalar_lea.vmem [#allocation5], 64
        %v213 = vld [vmem:[%s212] sm:$0xff]
        %v214 = vld [vmem:[%s212 + $0x8] sm:$0xff]
        %v215 = vld [vmem:[%s212 + $0x10] sm:$0xff]
        %v216 = vld [vmem:[%s212 + $0x18] sm:$0xff]
        %v217 = vmul.f32 %v183, %v203
        %v218 = vmul.f32 %v184, %v204
        %v219 = vmul.f32 %v185, %v205
        %v220 = vmul.f32 %v186, %v206
        %v221 = vmul.f32 %v188, %v208
        %v222 = vmul.f32 %v190, %v209
        %v223 = vmul.f32 %v192, %v210
        %v224 = vmul.f32 %v194, %v211
        %v225 = vadd.f32 %v217, %v221
        %v226 = vadd.f32 %v218, %v222
        %v227 = vadd.f32 %v219, %v223
        %v228 = vadd.f32 %v220, %v224
        %v229 = vmul.f32 %v196, %v213
        %v230 = vmul.f32 %v198, %v214
        %v231 = vmul.f32 %v200, %v215
        %v232 = vmul.f32 %v202, %v216
        %v233 = vadd.f32 %v225, %v229
        %v234 = vadd.f32 %v226, %v230
        %v235 = vadd.f32 %v227, %v231
        %v236 = vadd.f32 %v228, %v232
        %237 = vst [vmem:[%s180] sm:$0xff] %v233
        %238 = vst [vmem:[%s180 + $0x8] sm:$0xff] %v234
        %239 = vst [vmem:[%s180 + $0x10] sm:$0xff] %v235
        %240 = vst [vmem:[%s180 + $0x18] sm:$0xff] %v236
        %s241 = sand.u32 %s75, 1
        %s242 = scalar_lea.sflag [#allocation4], %s241
        %s243 = sand.u32 %s75, 1
        %s244 = smul.addr %s243, 32
        %s245 = scalar_lea.vmem [#allocation7], %s244
        // Predicated region
        $region37: #{tpu_custom_call.1} parent=27 // pred_check
          %p246 = pneg %p85
        $region38: #{tpu_custom_call.1} parent=27 // pred_check_branch
          %248 = sbr.rel (%p246) target = $region40
        $region39: #{tpu_custom_call.1} parent=27 // pred_region
          %s249 = smul.u32 4, %s20
          %251 = vsyncadd %s242, 0
          %s252 = smul.addr %s249, 8
          %s253 = scalar_lea.hbm %s2, %s252
          %s254 = sshll.u32 %s245, 4
          %s255 = int_to_ptr.vmem [resolvable:$true] %s254
          %s256 = sshll.u32 %s253, 4
          %s257 = int_to_ptr.hbm [resolvable:$true] %s256
          %262 = dma.vmem_to_hbm [thread:$0]  %s255, 512, %s257, %s242, 128, 128, 8
        $region40: #{tpu_custom_call.1} parent=27 // pred_fallthru
          _
      $region28: #{tpu_custom_call.1} parent=5 // pred_fallthru
        _
      %p263 = scmp.le.s32.totalorder 2, %s15
      // Predicated region
      $region41: #{tpu_custom_call.1} parent=5 // pred_check
        %p264 = pneg %p263
      $region42: #{tpu_custom_call.1} parent=5 // pred_check_branch
        %266 = sbr.rel (%p264) target = $region44
      $region43: #{tpu_custom_call.1} parent=5 // pred_region
        %s267 = ssub.s32 %s15, 2
        // Predicated region
        $region45: #{tpu_custom_call.1} parent=43 // pred_check
          %p268 = pneg %p91
        $region46: #{tpu_custom_call.1} parent=43 // pred_check_branch
          %270 = sbr.rel (%p268) target = $region48
        $region47: #{tpu_custom_call.1} parent=43 // pred_region
          %s271 = sand.u32 %s76, 1
          %s272 = scalar_lea.sflag [#allocation4], %s271
          %s273 = sand.u32 %s76, 1
          %s274 = smul.addr %s273, 32
          %s275 = scalar_lea.vmem [#allocation7], %s274
          %277 = dma.done %s272, 512
        $region48: #{tpu_custom_call.1} parent=43 // pred_fallthru
          _
      $region44: #{tpu_custom_call.1} parent=5 // pred_fallthru
        _
    $region6: #{tpu_custom_call.1} parent=1 // loop_footer
      %s19 = sadd.s32 1, %s15
    $region7: #{tpu_custom_call.1} parent=1 // loop_footer_branch
      %14 = sbr.rel target = $region3
    $region8: #{tpu_custom_call.1} parent=1 // loop_exit
      _
    %278 = vsyncpa [#allocation3], 1
    %s279 = scalar_lea.sflag [#allocation3], 1
    %280 = vsyncpa %s279, 1
    %281 = vsyncpa [#allocation6], 1
    %282 = vsyncpa [#allocation4], 1
    %s283 = scalar_lea.sflag [#allocation4], 1
    %284 = vsyncpa %s283, 1

</llo_original>
